<compile_context>
chip_gen: v7x
topology: tpu7x:2x2x1
jax: 0.10.0
libtpu: 0.0.40
codegen_flags: <defaults>
</compile_context>

<pallas_src>
import jax
import jax.numpy as jnp
from jax.experimental import pallas as pl
from jax.experimental.pallas import tpu as pltpu


def _sublane(dtype) -> int:
    """Second-to-last-dim tiling requirement for a dtype."""
    return {1: 32, 2: 16, 4: 8}.get(jnp.dtype(dtype).itemsize, 8)


def _hw_budgets() -> tuple[int, int]:
    """(per-block byte budget, scoped-VMEM limit) sized per TPU generation.

    Input block ~= output block and Pallas double-buffers both, so the pipelined
    footprint is ~4x the budget; both choices leave ample headroom.
    """
    try:
        vmem_bytes = pltpu.get_tpu_info().vmem_capacity_bytes
    except Exception:  # pragma: no cover - conservative fallback (v7x-sized)
        vmem_bytes = 64 * 1024 * 1024
    if vmem_bytes >= 100 * 1024 * 1024:          # v5e / v6e: 128 MiB physical VMEM
        return 6 * 1024 * 1024, 80 * 1024 * 1024
    return 4 * 1024 * 1024, 48 * 1024 * 1024     # v7x: 64 MiB physical VMEM


def _pick_blocks(c: int, length: int, r: int, itemsize: int, sub: int,
                 budget: int) -> tuple[int, int]:
    """Pick (block_c, block_l): layout-legal tiles whose input block fits the budget.

    Prefers the longest lane-dense L tile (bigger DMAs, lane-dense output
    stores), then the largest channel tile. Falls back to the smallest legal
    tile if nothing fits (still bounded, unlike a full-C x full-L block).
    """
    c_cands = sorted({d for d in range(sub, c + 1, sub) if c % d == 0} | {c},
                     reverse=True)
    l_cands = sorted({d for d in range(128, length + 1, 128) if length % d == 0}
                     | {length}, reverse=True)
    for bl in l_cands:
        for bc in c_cands:
            if r * bc * bl * itemsize <= budget:
                return bc, bl
    return c_cands[-1], l_cands[-1]


def _pixel_shuffle_1d_kernel(x_ref, o_ref):
    """x_ref: (r, C_blk, L_blk) -> o_ref: (C_blk, L_blk * r).

    The r-interleave along the lane axis is an in-VMEM relayout, bounded per
    tile and overlapped with the block DMAs by the pipeline (the op is purely
    memory-bound).
    """
    x = x_ref[...]                                # (r, C_blk, L_blk)
    r, c_blk, l_blk = x.shape
    y = jnp.transpose(x, (1, 2, 0))               # (C_blk, L_blk, r)
    o_ref[...] = y.reshape(c_blk, l_blk * r)


def pixel_shuffle_1d(x: jax.Array, upscale_factor: int, *,
                     block_c: int | None = None,
                     block_l: int | None = None) -> jax.Array:
    """Pallas implementation of PixelShuffle1d.forward: (B, C*r, L) -> (B, C, L*r)."""
    b, cr, length = x.shape
    r = int(upscale_factor)
    if cr % r != 0:
        raise ValueError("channel dim must be divisible by upscale_factor")
    c = cr // r
    out_len = length * r
    itemsize = jnp.dtype(x.dtype).itemsize
    sub = _sublane(x.dtype)
    auto_mode = block_c is None and block_l is None

    budget, vmem_limit = _hw_budgets()
    auto_c, auto_l = _pick_blocks(c, length, r, itemsize, sub, budget)
    if block_c is None:
        block_c = auto_c
    if block_l is None:
        block_l = auto_l

    if c % block_c != 0 or not (block_c == c or block_c % sub == 0):
        raise ValueError(f"block_c={block_c} must divide C={c} and be a multiple "
                         f"of the sublane tile ({sub}) or equal C")
    if length % block_l != 0 or not (block_l == length or block_l % 128 == 0):
        raise ValueError(f"block_l={block_l} must divide L={length} and be a "
                         f"multiple of 128 or equal L")

    num_c = c // block_c
    num_l = length // block_l

    # v7x megacore guard: make sure there are >= 2 parallel grid points when the
    # shape allows it (harmless on single-TC v5e/v6e: one extra ~0.35us step).
    if auto_mode and b * num_c * num_l < 2:
        l_splits = [d for d in range(128, length, 128) if length % d == 0]
        c_splits = [d for d in range(sub, c, sub) if c % d == 0]
        if l_splits:
            block_l = max(l_splits)
            num_l = length // block_l
        elif c_splits:
            block_c = max(c_splits)
            num_c = c // block_c

    # Free reshape (metadata only): input channel row k*C + c  <->  (k, c) in
    # (B, r, C, L), so one rectangular BlockSpec tile covers the r sub-channel
    # slabs feeding one output tile.
    x4 = x.reshape(b, r, c, length)

    in_spec = pl.BlockSpec((pl.Squeezed(), r, block_c, block_l),
                           lambda bi, ci, li: (bi, 0, ci, li))
    out_spec = pl.BlockSpec((pl.Squeezed(), block_c, block_l * r),
                            lambda bi, ci, li: (bi, ci, li))

    cost = pl.CostEstimate(flops=0, transcendentals=0,
                           bytes_accessed=int(2 * x.size * itemsize))

    return pl.pallas_call(
        _pixel_shuffle_1d_kernel,
        out_shape=jax.ShapeDtypeStruct((b, c, out_len), x.dtype),
        grid=(b, num_c, num_l),
        in_specs=[in_spec],
        out_specs=out_spec,
        compiler_params=pltpu.CompilerParams(
            dimension_semantics=("parallel", "parallel", "parallel"),
            vmem_limit_bytes=vmem_limit,
        ),
        cost_estimate=cost,
    )(x4)


def _reference_pixel_shuffle_1d(x: jax.Array, upscale_factor: int) -> jax.Array:
    """Pure-JAX reference mirroring the torch code exactly."""
    b, cr, length = x.shape
    c = cr // upscale_factor
    y = x.reshape(b, upscale_factor, c, length)
    y = jnp.transpose(y, (0, 2, 3, 1))
    return y.reshape(b, c, length * upscale_factor)


if __name__ == "__main__":
    key = jax.random.PRNGKey(0)

    # 1) r=2, tiny shape (C < sublane tile and L < 128 -> full-dim blocks).
    r1 = 2
    x1 = jax.random.normal(key, (2, 4 * r1, 16), dtype=jnp.float32)
    out1 = jax.block_until_ready(pixel_shuffle_1d(x1, r1))
    ref1 = _reference_pixel_shuffle_1d(x1, r1)
    assert out1.shape == ref1.shape and out1.dtype == ref1.dtype
    assert jnp.array_equal(out1, ref1), "case 1 (r=2, small) mismatch"

    # 2) r=3, explicit L tiling (L=256, block_l=128 -> grid (2, 1, 2)).
    r2 = 3
    x2 = jax.random.normal(jax.random.fold_in(key, 1), (2, 8 * r2, 256),
                           dtype=jnp.float32)
    out2 = jax.block_until_ready(pixel_shuffle_1d(x2, r2, block_c=8, block_l=128))
    assert jnp.array_equal(out2, _reference_pixel_shuffle_1d(x2, r2)), \
        "case 2 (r=3, L-tiled) mismatch"

    # 3) r=4, B=1: exercises the auto block picker + megacore grid-split guard.
    r3 = 4
    x3 = jax.random.normal(jax.random.fold_in(key, 2), (1, 16 * r3, 128),
                           dtype=jnp.float32)
    out3 = jax.block_until_ready(pixel_shuffle_1d(x3, r3))
    assert jnp.array_equal(out3, _reference_pixel_shuffle_1d(x3, r3)), \
        "case 3 (r=4, B=1) mismatch"

    print("KERNEL_OK")
</pallas_src>

<mosaic_0001>
module attributes {stable_mosaic.version = 11 : i64} {
  func.func @_pixel_shuffle_1d_kernel(%arg0: i32, %arg1: i32, %arg2: i32, %arg3: memref<1x2x4x16xf32, #tpu.memory_space<vmem>>, %arg4: memref<1x4x32xf32, #tpu.memory_space<vmem>>) attributes {dimension_semantics = [#tpu.dimension_semantics<parallel>, #tpu.dimension_semantics<parallel>, #tpu.dimension_semantics<parallel>], iteration_bounds = array<i64: 2, 1, 1>, scalar_prefetch = 0 : i64, scratch_operands = 0 : i64, tpu.core_type = #tpu.core_type<tc>, window_params = [{transform_indices = @transform_0, window_bounds = array<i64: 1, 2, 4, 16>}, {transform_indices = @transform_1, window_bounds = array<i64: 1, 4, 32>}]} {
    %c0 = arith.constant 0 : index
    %c0_0 = arith.constant 0 : index
    %c0_1 = arith.constant 0 : index
    %c0_2 = arith.constant 0 : index
    %0 = vector.load %arg3[%c0, %c0_0, %c0_1, %c0_2] : memref<1x2x4x16xf32, #tpu.memory_space<vmem>>, vector<1x2x4x16xf32>
    %1 = vector.shape_cast %0 : vector<1x2x4x16xf32> to vector<2x4x16xf32>
    %2 = tpu.transpose %1, [1, 2, 0] : vector<2x4x16xf32> -> vector<4x16x2xf32>
    %3 = vector.shape_cast %2 : vector<4x16x2xf32> to vector<4x32xf32>
    %c0_3 = arith.constant 0 : index
    %c0_4 = arith.constant 0 : index
    %c0_5 = arith.constant 0 : index
    %4 = vector.load %arg4[%c0_3, %c0_4, %c0_5] : memref<1x4x32xf32, #tpu.memory_space<vmem>>, vector<1x4x32xf32>
    %5 = vector.shape_cast %4 : vector<1x4x32xf32> to vector<4x32xf32>
    %6 = vector.shape_cast %3 : vector<4x32xf32> to vector<1x4x32xf32>
    tpu.vector_store %arg4[%c0_3, %c0_4, %c0_5], %6 {strides = array<i32>} : memref<1x4x32xf32, #tpu.memory_space<vmem>>, vector<1x4x32xf32>,
    return
  }
  func.func @transform_0(%arg0: i32, %arg1: i32, %arg2: i32) -> (i32, i32, i32, i32) {
    %c0_i32 = arith.constant 0 : i32
    %c0_i32_0 = arith.constant 0 : i32
    return %arg0, %c0_i32, %arg1, %arg2 : i32, i32, i32, i32
  }
  func.func @transform_1(%arg0: i32, %arg1: i32, %arg2: i32) -> (i32, i32, i32) {
    %c0_i32 = arith.constant 0 : i32
    return %arg0, %arg1, %arg2 : i32, i32, i32
  }
}

</mosaic_0001>

<llo_original>
// kernel: tpu_custom_call.1
$region0: #{tpu_custom_call.1}
  #allocation0 [shape = 'u32[]', space=smem, size = 0x4, offset = 0x4, fixed_abs, tag = 'smem constant byte address 0x4 - core index']
  #allocation1 [shape = 'u32[144,128]{1,0:T(1,128)}', space=vmem, size = 0x12000, scoped, tag = 'internal scratch']
  %s0 = inlined_call_operand.hbm [shape: f32[2,2,4,16], index: 0, kind: input, shape index: {}]
  %s1 = inlined_call_operand.hbm [shape: f32[2,4,32], index: 1, kind: output, shape index: {}]
  %s2 = sld [smem:[#allocation0]]
  $region41: #{tpu_custom_call.1} parent=0
    _
  %s4 = ssub.s32 1, %s2
  %s5 = scalar_select 0, %s4, %s2
  $region1: #{tpu_custom_call.1} parent=0
    #allocation2 [shape = 'u8[8192]{0}', space=vmem, size = 0x2000, scoped, tag = 'input window, operand 0']
    #allocation3 [shape = 's32[2]{0}', space=sflag, size = 0x8, scoped, tag = 'scoped memory for tpu_custom_call.1']
    #allocation4 [shape = 's32[2]{0}', space=sflag, size = 0x8, scoped, tag = 'scoped memory for tpu_custom_call.1']
    #allocation5 [shape = 'u8[4096]{0}', space=vmem, size = 0x1000, scoped, tag = 'output window, operand 0']
    %6 = vsyncpa [#allocation3], 0
    %s7 = scalar_lea.sflag [#allocation3], 1
    %8 = vsyncpa %s7, 0
    %9 = vsyncpa [#allocation4], 0
    %s10 = scalar_lea.sflag [#allocation4], 1
    %11 = vsyncpa %s10, 0
    loop: start=0, step=1, limit=4
    $region2: #{tpu_custom_call.1} parent=1 // loop_pre_header
      _
    $region3: #{tpu_custom_call.1} parent=1 // loop_header
      %s13 = sphi 0, %s17
      %p14 = scmp.ge.s32.totalorder %s13, 4
      %s20 = sphi 0, %s39
      %s21 = sphi 0, %s35
      %s22 = sphi 0, %s31
      %s23 = sphi 0, %s20
      %s24 = sphi 0, %s21
      %s25 = sphi 0, %s22
      %s26 = sphi 0, %s23
      %s27 = sphi 0, %s24
      %s28 = sphi 0, %s25
      %s46 = sphi 0, %s48
      %s49 = sphi 0, %s46
      %s50 = sphi 0, %s49
      %s66 = sphi 0, %s50
      %s76 = sphi 0, %s78
      %s79 = sphi 0, %s76
      %s80 = sphi 0, %s79
      %s96 = sphi 0, %s80
    $region4: #{tpu_custom_call.1} parent=1 // loop_header_branch
      %16 = sbr.rel (%p14) target = $region8
    $region5: #{tpu_custom_call.1} parent=1 // loop_body
      %s18 = ssub.s32 %s13, 1
      %s19 = ssub.s32 %s13, 2
      %s29 = sadd.s32 1, %s22
      %p30 = scmp.ge.s32.totalorder %s29, 1
      %s31 = scalar_select %p30, 0, %s29
      %s32 = sadd.s32 1, %s21
      %s33 = scalar_select %p30, %s32, %s21
      %p34 = scmp.ge.s32.totalorder %s33, 1
      %s35 = scalar_select %p34, 0, %s33
      %s36 = sadd.s32 1, %s20
      %s37 = scalar_select %p34, %s36, %s20
      %p38 = scmp.ge.s32.totalorder %s37, 2
      %s39 = scalar_select %p38, 0, %s37
      %s40 = ssub.s32 %s20, %s39
      %s41 = ssub.s32 %s21, %s35
      %s42 = sor.u32 %s40, %s41
      %s43 = ssub.s32 %s22, %s31
      %s44 = sor.u32 %s42, %s43
      %p45 = scmp.eq.s32.totalorder %s44, 0
      %s47 = sadd.s32 %s46, 1
      %s48 = scalar_select %p45, %s46, %s47
      %p51 = pneg %p45
      %p52 = scmp.eq.s32.totalorder %s13, 1
      %p53 = por %p51, %p52
      %p54 = scmp.ne.s32.totalorder %s46, %s49
      %p55 = scmp.eq.s32.totalorder %s13, 0
      %p56 = por %p54, %p55
      %p57 = scmp.ne.s32.totalorder %s46, %s49
      %p58 = scmp.eq.s32.totalorder %s18, 1
      %p59 = por %p57, %p58
      %p60 = scmp.ne.s32.totalorder %s49, %s50
      %p61 = scmp.eq.s32.totalorder %s18, 0
      %p62 = por %p60, %p61
      %p63 = scmp.ne.s32.totalorder %s49, %s50
      %p64 = scmp.eq.s32.totalorder %s19, 1
      %p65 = por %p63, %p64
      %p67 = scmp.ne.s32.totalorder %s50, %s66
      %p68 = scmp.eq.s32.totalorder %s19, 0
      %p69 = por %p67, %p68
      %s70 = ssub.s32 %s20, %s39
      %s71 = ssub.s32 %s21, %s35
      %s72 = sor.u32 %s70, %s71
      %s73 = ssub.s32 %s22, %s31
      %s74 = sor.u32 %s72, %s73
      %p75 = scmp.eq.s32.totalorder %s74, 0
      %s77 = sadd.s32 %s76, 1
      %s78 = scalar_select %p75, %s76, %s77
      %p81 = pneg %p75
      %p82 = scmp.eq.s32.totalorder %s13, 1
      %p83 = por %p81, %p82
      %p84 = scmp.ne.s32.totalorder %s76, %s79
      %p85 = scmp.eq.s32.totalorder %s13, 0
      %p86 = por %p84, %p85
      %p87 = scmp.ne.s32.totalorder %s76, %s79
      %p88 = scmp.eq.s32.totalorder %s18, 1
      %p89 = por %p87, %p88
      %p90 = scmp.ne.s32.totalorder %s79, %s80
      %p91 = scmp.eq.s32.totalorder %s18, 0
      %p92 = por %p90, %p91
      %p93 = scmp.ne.s32.totalorder %s79, %s80
      %p94 = scmp.eq.s32.totalorder %s19, 1
      %p95 = por %p93, %p94
      %p97 = scmp.ne.s32.totalorder %s80, %s96
      %p98 = scmp.eq.s32.totalorder %s19, 0
      %p99 = por %p97, %p98
      %p100 = scmp.le.s32.totalorder 1, %s13
      %p101 = scmp.lt.s32.totalorder %s13, 3
      %p102 = pnand %p100, %p101
      %p103 = pneg %p102
      // Predicated region
      $region9: #{tpu_custom_call.1} parent=5 // pred_check
        _
      $region10: #{tpu_custom_call.1} parent=5 // pred_check_branch
        %105 = sbr.rel (%p102) target = $region12
      $region11: #{tpu_custom_call.1} parent=5 // pred_region
        %s106 = ssub.s32 %s13, 1
      $region12: #{tpu_custom_call.1} parent=5 // pred_fallthru
        _
      %p107 = scmp.lt.s32.totalorder %s13, 2
      // Predicated region
      $region13: #{tpu_custom_call.1} parent=5 // pred_check
        %p108 = pneg %p107
      $region14: #{tpu_custom_call.1} parent=5 // pred_check_branch
        %110 = sbr.rel (%p108) target = $region16
      $region15: #{tpu_custom_call.1} parent=5 // pred_region
        // Predicated region
        $region17: #{tpu_custom_call.1} parent=15 // pred_check
          %p111 = pneg %p56
        $region18: #{tpu_custom_call.1} parent=15 // pred_check_branch
          %113 = sbr.rel (%p111) target = $region20
        $region19: #{tpu_custom_call.1} parent=15 // pred_region
          %s114 = sand.u32 %s46, 1
          %s115 = scalar_lea.sflag [#allocation3], %s114
          %s116 = sand.u32 %s46, 1
          %s117 = smul.addr %s116, 8
          %s118 = scalar_lea.vmem [#allocation2], %s117
          %s120 = ssub.s32 128, 128
          %121 = vsyncadd %s115, %s120
          %s122 = sadd.s32 %s22, %s21
          %s123 = smul.addr %s20, 2
          %s124 = sadd.s32 %s122, %s123
          %s125 = smul.addr %s124, 64
          %s126 = scalar_lea.hbm %s0, %s125
          %s127 = sshll.u32 %s118, 4
          %s128 = int_to_ptr.vmem [resolvable:$true] %s127
          %133 = dma.hbm_to_vmem [thread:$0]  %s126, 128, %s128, %s115, 64, 64, 4
        $region20: #{tpu_custom_call.1} parent=15 // pred_fallthru
          _
      $region16: #{tpu_custom_call.1} parent=5 // pred_fallthru
        _
      %p134 = scmp.le.s32.totalorder 1, %s13
      %p135 = scmp.lt.s32.totalorder %s13, 3
      %p136 = pnand %p134, %p135
      %p137 = pneg %p136
      // Predicated region
      $region21: #{tpu_custom_call.1} parent=5 // pred_check
        _
      $region22: #{tpu_custom_call.1} parent=5 // pred_check_branch
        %139 = sbr.rel (%p136) target = $region24
      $region23: #{tpu_custom_call.1} parent=5 // pred_region
        %s140 = ssub.s32 %s13, 1
        %s141 = sand.u32 %s49, 1
        %s142 = scalar_lea.sflag [#allocation3], %s141
        %s143 = sand.u32 %s49, 1
        %s144 = smul.addr %s143, 8
        %s145 = scalar_lea.vmem [#allocation2], %s144
        // Predicated region
        $region25: #{tpu_custom_call.1} parent=23 // pred_check
          %p146 = pneg %p62
        $region26: #{tpu_custom_call.1} parent=23 // pred_check_branch
          %148 = sbr.rel (%p146) target = $region28
        $region27: #{tpu_custom_call.1} parent=23 // pred_region
          %149 = dma.done %s142, 128
        $region28: #{tpu_custom_call.1} parent=23 // pred_fallthru
          _
        %s150 = sand.u32 %s49, 1
        %s151 = scalar_lea.sflag [#allocation3], %s150
        %s152 = sand.u32 %s49, 1
        %s153 = smul.addr %s152, 8
        %s154 = scalar_lea.vmem [#allocation2], %s153
        %p155 = pneg %p62
        %p156 = pneg %p59
        %p157 = pneg %p92
        %p158 = pneg %p89
        %s159 = sand.u32 %s79, 1
        %s160 = scalar_lea.sflag [#allocation4], %s159
        %s161 = sand.u32 %s79, 1
        %s162 = smul.addr %s161, 4
        %s163 = scalar_lea.vmem [#allocation5], %s162
        %v164 = vld [vmem:[%s145] sm:$0xf]
        %v165 = vld [vmem:[%s145 + $0x4] sm:$0xf]
        %166 = vxpose.xlu0.b32.start [1/16] %v164, 128
        %167 = vxpose.xlu0.b32.cont [2/16] 0.0, 128
        %168 = vxpose.xlu0.b32.cont [3/16] 0.0, 128
        %169 = vxpose.xlu0.b32.cont [4/16] 0.0, 128
        %170 = vxpose.xlu0.b32.cont [5/16] 0.0, 128
        %171 = vxpose.xlu0.b32.cont [6/16] 0.0, 128
        %172 = vxpose.xlu0.b32.cont [7/16] 0.0, 128
        %173 = vxpose.xlu0.b32.cont [8/16] 0.0, 128
        %174 = vxpose.xlu0.b32.cont [9/16] 0.0, 128
        %175 = vxpose.xlu0.b32.cont [10/16] 0.0, 128
        %176 = vxpose.xlu0.b32.cont [11/16] 0.0, 128
        %177 = vxpose.xlu0.b32.cont [12/16] 0.0, 128
        %178 = vxpose.xlu0.b32.cont [13/16] 0.0, 128
        %179 = vxpose.xlu0.b32.cont [14/16] 0.0, 128
        %180 = vxpose.xlu0.b32.cont [15/16] 0.0, 128
        %181 = vxpose.xlu0.b32.end [16/16] 0.0, 128
        %v182 = vpop.trf.xlu0
        %v183 = vpop.trf.xlu0
        %v184 = vpop.trf.xlu0
        %v185 = vpop.trf.xlu0
        %v186 = vpop.trf.xlu0
        %v187 = vpop.trf.xlu0
        %v188 = vpop.trf.xlu0
        %v189 = vpop.trf.xlu0
        %v190 = vpop.trf.xlu0
        %v191 = vpop.trf.xlu0
        %v192 = vpop.trf.xlu0
        %v193 = vpop.trf.xlu0
        %v194 = vpop.trf.xlu0
        %v195 = vpop.trf.xlu0
        %v196 = vpop.trf.xlu0
        %v197 = vpop.trf.xlu0
        %198 = vxpose.xlu0.b32.start [1/16] %v165, 128
        %199 = vxpose.xlu0.b32.cont [2/16] 0.0, 128
        %200 = vxpose.xlu0.b32.cont [3/16] 0.0, 128
        %201 = vxpose.xlu0.b32.cont [4/16] 0.0, 128
        %202 = vxpose.xlu0.b32.cont [5/16] 0.0, 128
        %203 = vxpose.xlu0.b32.cont [6/16] 0.0, 128
        %204 = vxpose.xlu0.b32.cont [7/16] 0.0, 128
        %205 = vxpose.xlu0.b32.cont [8/16] 0.0, 128
        %206 = vxpose.xlu0.b32.cont [9/16] 0.0, 128
        %207 = vxpose.xlu0.b32.cont [10/16] 0.0, 128
        %208 = vxpose.xlu0.b32.cont [11/16] 0.0, 128
        %209 = vxpose.xlu0.b32.cont [12/16] 0.0, 128
        %210 = vxpose.xlu0.b32.cont [13/16] 0.0, 128
        %211 = vxpose.xlu0.b32.cont [14/16] 0.0, 128
        %212 = vxpose.xlu0.b32.cont [15/16] 0.0, 128
        %213 = vxpose.xlu0.b32.end [16/16] 0.0, 128
        %v214 = vpop.trf.xlu0
        %v215 = vpop.trf.xlu0
        %v216 = vpop.trf.xlu0
        %v217 = vpop.trf.xlu0
        %v218 = vpop.trf.xlu0
        %v219 = vpop.trf.xlu0
        %v220 = vpop.trf.xlu0
        %v221 = vpop.trf.xlu0
        %v222 = vpop.trf.xlu0
        %v223 = vpop.trf.xlu0
        %v224 = vpop.trf.xlu0
        %v225 = vpop.trf.xlu0
        %v226 = vpop.trf.xlu0
        %v227 = vpop.trf.xlu0
        %v228 = vpop.trf.xlu0
        %v229 = vpop.trf.xlu0
        %v230 = vcombine.high %v182, 0.0
        %v232 = vunpack.c.l.s4 1983009808
        %v233 = vunpack.c.0.s8 %v232
        %v234 = vlaneseq
        %v235 = vshrl.u32 %v234, 7
        %v236 = vsub.s32 %v233, %v235
        %v237 = vrot.slane %v182, %v236
        %v239 = vunpack.c.l.s4 1983009808
        %v240 = vunpack.c.0.s8 %v239
        %v241 = vlaneseq
        %v242 = vshrl.u32 %v241, 7
        %v243 = vsub.s32 %v240, %v242
        %v244 = vrot.slane %v230, %v243
        %v245 = vcombine.high %v214, 0.0
        %v247 = vunpack.c.l.s4 1983009808
        %v248 = vunpack.c.0.s8 %v247
        %v249 = vlaneseq
        %v250 = vshrl.u32 %v249, 7
        %v251 = vsub.s32 %v248, %v250
        %v252 = vrot.slane %v214, %v251
        %v254 = vunpack.c.l.s4 1983009808
        %v255 = vunpack.c.0.s8 %v254
        %v256 = vlaneseq
        %v257 = vshrl.u32 %v256, 7
        %v258 = vsub.s32 %v255, %v257
        %v259 = vrot.slane %v245, %v258
        %v260 = vcombine.low %v237, %v252
        %v261 = vcombine.high %v237, %v252
        %v263 = vunpack.c.l.s4 1934713408
        %v264 = vunpack.c.0.s8 %v263
        %v265 = vlaneseq
        %v266 = vshrl.u32 %v265, 7
        %v267 = vsub.s32 %v264, %v266
        %v268 = vrot.slane %v260, %v267
        %v270 = vunpack.c.l.s4 1934713408
        %v271 = vunpack.c.0.s8 %v270
        %v272 = vlaneseq
        %v273 = vshrl.u32 %v272, 7
        %v274 = vsub.s32 %v271, %v273
        %v275 = vrot.slane %v261, %v274
        %v276 = vcombine.low %v244, %v259
        %v277 = vcombine.high %v244, %v259
        %v279 = vunpack.c.l.s4 1934713408
        %v280 = vunpack.c.0.s8 %v279
        %v281 = vlaneseq
        %v282 = vshrl.u32 %v281, 7
        %v283 = vsub.s32 %v280, %v282
        %v284 = vrot.slane %v276, %v283
        %v286 = vunpack.c.l.s4 1934713408
        %v287 = vunpack.c.0.s8 %v286
        %v288 = vlaneseq
        %v289 = vshrl.u32 %v288, 7
        %v290 = vsub.s32 %v287, %v289
        %v291 = vrot.slane %v277, %v290
        %v292 = vcombine.high %v268, 0.0
        %v293 = vcombine.high %v275, 0.0
        %v294 = vcombine.high %v284, 0.0
        %v295 = vcombine.high %v291, 0.0
        %v296 = vcombine.high %v183, 0.0
        %v298 = vunpack.c.l.s4 1983009808
        %v299 = vunpack.c.0.s8 %v298
        %v300 = vlaneseq
        %v301 = vshrl.u32 %v300, 7
        %v302 = vsub.s32 %v299, %v301
        %v303 = vrot.slane %v183, %v302
        %v305 = vunpack.c.l.s4 1983009808
        %v306 = vunpack.c.0.s8 %v305
        %v307 = vlaneseq
        %v308 = vshrl.u32 %v307, 7
        %v309 = vsub.s32 %v306, %v308
        %v310 = vrot.slane %v296, %v309
        %v311 = vcombine.high %v215, 0.0
        %v313 = vunpack.c.l.s4 1983009808
        %v314 = vunpack.c.0.s8 %v313
        %v315 = vlaneseq
        %v316 = vshrl.u32 %v315, 7
        %v317 = vsub.s32 %v314, %v316
        %v318 = vrot.slane %v215, %v317
        %v320 = vunpack.c.l.s4 1983009808
        %v321 = vunpack.c.0.s8 %v320
        %v322 = vlaneseq
        %v323 = vshrl.u32 %v322, 7
        %v324 = vsub.s32 %v321, %v323
        %v325 = vrot.slane %v311, %v324
        %v326 = vcombine.low %v303, %v318
        %v327 = vcombine.high %v303, %v318
        %v329 = vunpack.c.l.s4 1934713408
        %v330 = vunpack.c.0.s8 %v329
        %v331 = vlaneseq
        %v332 = vshrl.u32 %v331, 7
        %v333 = vsub.s32 %v330, %v332
        %v334 = vrot.slane %v326, %v333
        %v336 = vunpack.c.l.s4 1934713408
        %v337 = vunpack.c.0.s8 %v336
        %v338 = vlaneseq
        %v339 = vshrl.u32 %v338, 7
        %v340 = vsub.s32 %v337, %v339
        %v341 = vrot.slane %v327, %v340
        %v342 = vcombine.low %v310, %v325
        %v343 = vcombine.high %v310, %v325
        %v345 = vunpack.c.l.s4 1934713408
        %v346 = vunpack.c.0.s8 %v345
        %v347 = vlaneseq
        %v348 = vshrl.u32 %v347, 7
        %v349 = vsub.s32 %v346, %v348
        %v350 = vrot.slane %v342, %v349
        %v352 = vunpack.c.l.s4 1934713408
        %v353 = vunpack.c.0.s8 %v352
        %v354 = vlaneseq
        %v355 = vshrl.u32 %v354, 7
        %v356 = vsub.s32 %v353, %v355
        %v357 = vrot.slane %v343, %v356
        %v358 = vcombine.high %v334, 0.0
        %v359 = vcombine.high %v341, 0.0
        %v360 = vcombine.high %v350, 0.0
        %v361 = vcombine.high %v357, 0.0
        %362 = vxpose.xlu0.b32.start [1/16] %v268, 128
        %363 = vxpose.xlu0.b32.cont [2/16] 0.0, 128
        %364 = vxpose.xlu0.b32.cont [3/16] 0.0, 128
        %365 = vxpose.xlu0.b32.cont [4/16] 0.0, 128
        %366 = vxpose.xlu0.b32.cont [5/16] 0.0, 128
        %367 = vxpose.xlu0.b32.cont [6/16] 0.0, 128
        %368 = vxpose.xlu0.b32.cont [7/16] 0.0, 128
        %369 = vxpose.xlu0.b32.cont [8/16] 0.0, 128
        %370 = vxpose.xlu0.b32.cont [9/16] 0.0, 128
        %371 = vxpose.xlu0.b32.cont [10/16] 0.0, 128
        %372 = vxpose.xlu0.b32.cont [11/16] 0.0, 128
        %373 = vxpose.xlu0.b32.cont [12/16] 0.0, 128
        %374 = vxpose.xlu0.b32.cont [13/16] 0.0, 128
        %375 = vxpose.xlu0.b32.cont [14/16] 0.0, 128
        %376 = vxpose.xlu0.b32.cont [15/16] 0.0, 128
        %377 = vxpose.xlu0.b32.end [16/16] 0.0, 128
        %v378 = vpop.trf.xlu0
        %v379 = vpop.trf.xlu0
        %v380 = vpop.trf.xlu0
        %v381 = vpop.trf.xlu0
        %v382 = vpop.trf.xlu0
        %v383 = vpop.trf.xlu0
        %v384 = vpop.trf.xlu0
        %v385 = vpop.trf.xlu0
        %v386 = vpop.trf.xlu0
        %v387 = vpop.trf.xlu0
        %v388 = vpop.trf.xlu0
        %v389 = vpop.trf.xlu0
        %v390 = vpop.trf.xlu0
        %v391 = vpop.trf.xlu0
        %v392 = vpop.trf.xlu0
        %v393 = vpop.trf.xlu0
        %394 = vxpose.xlu0.b32.start [1/16] %v292, 128
        %395 = vxpose.xlu0.b32.cont [2/16] 0.0, 128
        %396 = vxpose.xlu0.b32.cont [3/16] 0.0, 128
        %397 = vxpose.xlu0.b32.cont [4/16] 0.0, 128
        %398 = vxpose.xlu0.b32.cont [5/16] 0.0, 128
        %399 = vxpose.xlu0.b32.cont [6/16] 0.0, 128
        %400 = vxpose.xlu0.b32.cont [7/16] 0.0, 128
        %401 = vxpose.xlu0.b32.cont [8/16] 0.0, 128
        %402 = vxpose.xlu0.b32.cont [9/16] 0.0, 128
        %403 = vxpose.xlu0.b32.cont [10/16] 0.0, 128
        %404 = vxpose.xlu0.b32.cont [11/16] 0.0, 128
        %405 = vxpose.xlu0.b32.cont [12/16] 0.0, 128
        %406 = vxpose.xlu0.b32.cont [13/16] 0.0, 128
        %407 = vxpose.xlu0.b32.cont [14/16] 0.0, 128
        %408 = vxpose.xlu0.b32.cont [15/16] 0.0, 128
        %409 = vxpose.xlu0.b32.end [16/16] 0.0, 128
        %v410 = vpop.trf.xlu0
        %v411 = vpop.trf.xlu0
        %v412 = vpop.trf.xlu0
        %v413 = vpop.trf.xlu0
        %v414 = vpop.trf.xlu0
        %v415 = vpop.trf.xlu0
        %v416 = vpop.trf.xlu0
        %v417 = vpop.trf.xlu0
        %v418 = vpop.trf.xlu0
        %v419 = vpop.trf.xlu0
        %v420 = vpop.trf.xlu0
        %v421 = vpop.trf.xlu0
        %v422 = vpop.trf.xlu0
        %v423 = vpop.trf.xlu0
        %v424 = vpop.trf.xlu0
        %v425 = vpop.trf.xlu0
        %426 = vxpose.xlu0.b32.start [1/16] %v275, 128
        %427 = vxpose.xlu0.b32.cont [2/16] 0.0, 128
        %428 = vxpose.xlu0.b32.cont [3/16] 0.0, 128
        %429 = vxpose.xlu0.b32.cont [4/16] 0.0, 128
        %430 = vxpose.xlu0.b32.cont [5/16] 0.0, 128
        %431 = vxpose.xlu0.b32.cont [6/16] 0.0, 128
        %432 = vxpose.xlu0.b32.cont [7/16] 0.0, 128
        %433 = vxpose.xlu0.b32.cont [8/16] 0.0, 128
        %434 = vxpose.xlu0.b32.cont [9/16] 0.0, 128
        %435 = vxpose.xlu0.b32.cont [10/16] 0.0, 128
        %436 = vxpose.xlu0.b32.cont [11/16] 0.0, 128
        %437 = vxpose.xlu0.b32.cont [12/16] 0.0, 128
        %438 = vxpose.xlu0.b32.cont [13/16] 0.0, 128
        %439 = vxpose.xlu0.b32.cont [14/16] 0.0, 128
        %440 = vxpose.xlu0.b32.cont [15/16] 0.0, 128
        %441 = vxpose.xlu0.b32.end [16/16] 0.0, 128
        %v442 = vpop.trf.xlu0
        %v443 = vpop.trf.xlu0
        %v444 = vpop.trf.xlu0
        %v445 = vpop.trf.xlu0
        %v446 = vpop.trf.xlu0
        %v447 = vpop.trf.xlu0
        %v448 = vpop.trf.xlu0
        %v449 = vpop.trf.xlu0
        %v450 = vpop.trf.xlu0
        %v451 = vpop.trf.xlu0
        %v452 = vpop.trf.xlu0
        %v453 = vpop.trf.xlu0
        %v454 = vpop.trf.xlu0
        %v455 = vpop.trf.xlu0
        %v456 = vpop.trf.xlu0
        %v457 = vpop.trf.xlu0
        %458 = vxpose.xlu0.b32.start [1/16] %v293, 128
        %459 = vxpose.xlu0.b32.cont [2/16] 0.0, 128
        %460 = vxpose.xlu0.b32.cont [3/16] 0.0, 128
        %461 = vxpose.xlu0.b32.cont [4/16] 0.0, 128
        %462 = vxpose.xlu0.b32.cont [5/16] 0.0, 128
        %463 = vxpose.xlu0.b32.cont [6/16] 0.0, 128
        %464 = vxpose.xlu0.b32.cont [7/16] 0.0, 128
        %465 = vxpose.xlu0.b32.cont [8/16] 0.0, 128
        %466 = vxpose.xlu0.b32.cont [9/16] 0.0, 128
        %467 = vxpose.xlu0.b32.cont [10/16] 0.0, 128
        %468 = vxpose.xlu0.b32.cont [11/16] 0.0, 128
        %469 = vxpose.xlu0.b32.cont [12/16] 0.0, 128
        %470 = vxpose.xlu0.b32.cont [13/16] 0.0, 128
        %471 = vxpose.xlu0.b32.cont [14/16] 0.0, 128
        %472 = vxpose.xlu0.b32.cont [15/16] 0.0, 128
        %473 = vxpose.xlu0.b32.end [16/16] 0.0, 128
        %v474 = vpop.trf.xlu0
        %v475 = vpop.trf.xlu0
        %v476 = vpop.trf.xlu0
        %v477 = vpop.trf.xlu0
        %v478 = vpop.trf.xlu0
        %v479 = vpop.trf.xlu0
        %v480 = vpop.trf.xlu0
        %v481 = vpop.trf.xlu0
        %v482 = vpop.trf.xlu0
        %v483 = vpop.trf.xlu0
        %v484 = vpop.trf.xlu0
        %v485 = vpop.trf.xlu0
        %v486 = vpop.trf.xlu0
        %v487 = vpop.trf.xlu0
        %v488 = vpop.trf.xlu0
        %v489 = vpop.trf.xlu0
        %490 = vxpose.xlu0.b32.start [1/16] %v284, 128
        %491 = vxpose.xlu0.b32.cont [2/16] 0.0, 128
        %492 = vxpose.xlu0.b32.cont [3/16] 0.0, 128
        %493 = vxpose.xlu0.b32.cont [4/16] 0.0, 128
        %494 = vxpose.xlu0.b32.cont [5/16] 0.0, 128
        %495 = vxpose.xlu0.b32.cont [6/16] 0.0, 128
        %496 = vxpose.xlu0.b32.cont [7/16] 0.0, 128
        %497 = vxpose.xlu0.b32.cont [8/16] 0.0, 128
        %498 = vxpose.xlu0.b32.cont [9/16] 0.0, 128
        %499 = vxpose.xlu0.b32.cont [10/16] 0.0, 128
        %500 = vxpose.xlu0.b32.cont [11/16] 0.0, 128
        %501 = vxpose.xlu0.b32.cont [12/16] 0.0, 128
        %502 = vxpose.xlu0.b32.cont [13/16] 0.0, 128
        %503 = vxpose.xlu0.b32.cont [14/16] 0.0, 128
        %504 = vxpose.xlu0.b32.cont [15/16] 0.0, 128
        %505 = vxpose.xlu0.b32.end [16/16] 0.0, 128
        %v506 = vpop.trf.xlu0
        %v507 = vpop.trf.xlu0
        %v508 = vpop.trf.xlu0
        %v509 = vpop.trf.xlu0
        %v510 = vpop.trf.xlu0
        %v511 = vpop.trf.xlu0
        %v512 = vpop.trf.xlu0
        %v513 = vpop.trf.xlu0
        %v514 = vpop.trf.xlu0
        %v515 = vpop.trf.xlu0
        %v516 = vpop.trf.xlu0
        %v517 = vpop.trf.xlu0
        %v518 = vpop.trf.xlu0
        %v519 = vpop.trf.xlu0
        %v520 = vpop.trf.xlu0
        %v521 = vpop.trf.xlu0
        %522 = vxpose.xlu0.b32.start [1/16] %v294, 128
        %523 = vxpose.xlu0.b32.cont [2/16] 0.0, 128
        %524 = vxpose.xlu0.b32.cont [3/16] 0.0, 128
        %525 = vxpose.xlu0.b32.cont [4/16] 0.0, 128
        %526 = vxpose.xlu0.b32.cont [5/16] 0.0, 128
        %527 = vxpose.xlu0.b32.cont [6/16] 0.0, 128
        %528 = vxpose.xlu0.b32.cont [7/16] 0.0, 128
        %529 = vxpose.xlu0.b32.cont [8/16] 0.0, 128
        %530 = vxpose.xlu0.b32.cont [9/16] 0.0, 128
        %531 = vxpose.xlu0.b32.cont [10/16] 0.0, 128
        %532 = vxpose.xlu0.b32.cont [11/16] 0.0, 128
        %533 = vxpose.xlu0.b32.cont [12/16] 0.0, 128
        %534 = vxpose.xlu0.b32.cont [13/16] 0.0, 128
        %535 = vxpose.xlu0.b32.cont [14/16] 0.0, 128
        %536 = vxpose.xlu0.b32.cont [15/16] 0.0, 128
        %537 = vxpose.xlu0.b32.end [16/16] 0.0, 128
        %v538 = vpop.trf.xlu0
        %v539 = vpop.trf.xlu0
        %v540 = vpop.trf.xlu0
        %v541 = vpop.trf.xlu0
        %v542 = vpop.trf.xlu0
        %v543 = vpop.trf.xlu0
        %v544 = vpop.trf.xlu0
        %v545 = vpop.trf.xlu0
        %v546 = vpop.trf.xlu0
        %v547 = vpop.trf.xlu0
        %v548 = vpop.trf.xlu0
        %v549 = vpop.trf.xlu0
        %v550 = vpop.trf.xlu0
        %v551 = vpop.trf.xlu0
        %v552 = vpop.trf.xlu0
        %v553 = vpop.trf.xlu0
        %554 = vxpose.xlu0.b32.start [1/16] %v291, 128
        %555 = vxpose.xlu0.b32.cont [2/16] 0.0, 128
        %556 = vxpose.xlu0.b32.cont [3/16] 0.0, 128
        %557 = vxpose.xlu0.b32.cont [4/16] 0.0, 128
        %558 = vxpose.xlu0.b32.cont [5/16] 0.0, 128
        %559 = vxpose.xlu0.b32.cont [6/16] 0.0, 128
        %560 = vxpose.xlu0.b32.cont [7/16] 0.0, 128
        %561 = vxpose.xlu0.b32.cont [8/16] 0.0, 128
        %562 = vxpose.xlu0.b32.cont [9/16] 0.0, 128
        %563 = vxpose.xlu0.b32.cont [10/16] 0.0, 128
        %564 = vxpose.xlu0.b32.cont [11/16] 0.0, 128
        %565 = vxpose.xlu0.b32.cont [12/16] 0.0, 128
        %566 = vxpose.xlu0.b32.cont [13/16] 0.0, 128
        %567 = vxpose.xlu0.b32.cont [14/16] 0.0, 128
        %568 = vxpose.xlu0.b32.cont [15/16] 0.0, 128
        %569 = vxpose.xlu0.b32.end [16/16] 0.0, 128
        %v570 = vpop.trf.xlu0
        %v571 = vpop.trf.xlu0
        %v572 = vpop.trf.xlu0
        %v573 = vpop.trf.xlu0
        %v574 = vpop.trf.xlu0
        %v575 = vpop.trf.xlu0
        %v576 = vpop.trf.xlu0
        %v577 = vpop.trf.xlu0
        %v578 = vpop.trf.xlu0
        %v579 = vpop.trf.xlu0
        %v580 = vpop.trf.xlu0
        %v581 = vpop.trf.xlu0
        %v582 = vpop.trf.xlu0
        %v583 = vpop.trf.xlu0
        %v584 = vpop.trf.xlu0
        %v585 = vpop.trf.xlu0
        %586 = vxpose.xlu0.b32.start [1/16] %v295, 128
        %587 = vxpose.xlu0.b32.cont [2/16] 0.0, 128
        %588 = vxpose.xlu0.b32.cont [3/16] 0.0, 128
        %589 = vxpose.xlu0.b32.cont [4/16] 0.0, 128
        %590 = vxpose.xlu0.b32.cont [5/16] 0.0, 128
        %591 = vxpose.xlu0.b32.cont [6/16] 0.0, 128
        %592 = vxpose.xlu0.b32.cont [7/16] 0.0, 128
        %593 = vxpose.xlu0.b32.cont [8/16] 0.0, 128
        %594 = vxpose.xlu0.b32.cont [9/16] 0.0, 128
        %595 = vxpose.xlu0.b32.cont [10/16] 0.0, 128
        %596 = vxpose.xlu0.b32.cont [11/16] 0.0, 128
        %597 = vxpose.xlu0.b32.cont [12/16] 0.0, 128
        %598 = vxpose.xlu0.b32.cont [13/16] 0.0, 128
        %599 = vxpose.xlu0.b32.cont [14/16] 0.0, 128
        %600 = vxpose.xlu0.b32.cont [15/16] 0.0, 128
        %601 = vxpose.xlu0.b32.end [16/16] 0.0, 128
        %v602 = vpop.trf.xlu0
        %v603 = vpop.trf.xlu0
        %v604 = vpop.trf.xlu0
        %v605 = vpop.trf.xlu0
        %v606 = vpop.trf.xlu0
        %v607 = vpop.trf.xlu0
        %v608 = vpop.trf.xlu0
        %v609 = vpop.trf.xlu0
        %v610 = vpop.trf.xlu0
        %v611 = vpop.trf.xlu0
        %v612 = vpop.trf.xlu0
        %v613 = vpop.trf.xlu0
        %v614 = vpop.trf.xlu0
        %v615 = vpop.trf.xlu0
        %v616 = vpop.trf.xlu0
        %v617 = vpop.trf.xlu0
        %618 = vxpose.xlu0.b32.start [1/16] %v334, 128
        %619 = vxpose.xlu0.b32.cont [2/16] 0.0, 128
        %620 = vxpose.xlu0.b32.cont [3/16] 0.0, 128
        %621 = vxpose.xlu0.b32.cont [4/16] 0.0, 128
        %622 = vxpose.xlu0.b32.cont [5/16] 0.0, 128
        %623 = vxpose.xlu0.b32.cont [6/16] 0.0, 128
        %624 = vxpose.xlu0.b32.cont [7/16] 0.0, 128
        %625 = vxpose.xlu0.b32.cont [8/16] 0.0, 128
        %626 = vxpose.xlu0.b32.cont [9/16] 0.0, 128
        %627 = vxpose.xlu0.b32.cont [10/16] 0.0, 128
        %628 = vxpose.xlu0.b32.cont [11/16] 0.0, 128
        %629 = vxpose.xlu0.b32.cont [12/16] 0.0, 128
        %630 = vxpose.xlu0.b32.cont [13/16] 0.0, 128
        %631 = vxpose.xlu0.b32.cont [14/16] 0.0, 128
        %632 = vxpose.xlu0.b32.cont [15/16] 0.0, 128
        %633 = vxpose.xlu0.b32.end [16/16] 0.0, 128
        %v634 = vpop.trf.xlu0
        %v635 = vpop.trf.xlu0
        %v636 = vpop.trf.xlu0
        %v637 = vpop.trf.xlu0
        %v638 = vpop.trf.xlu0
        %v639 = vpop.trf.xlu0
        %v640 = vpop.trf.xlu0
        %v641 = vpop.trf.xlu0
        %v642 = vpop.trf.xlu0
        %v643 = vpop.trf.xlu0
        %v644 = vpop.trf.xlu0
        %v645 = vpop.trf.xlu0
        %v646 = vpop.trf.xlu0
        %v647 = vpop.trf.xlu0
        %v648 = vpop.trf.xlu0
        %v649 = vpop.trf.xlu0
        %650 = vxpose.xlu0.b32.start [1/16] %v358, 128
        %651 = vxpose.xlu0.b32.cont [2/16] 0.0, 128
        %652 = vxpose.xlu0.b32.cont [3/16] 0.0, 128
        %653 = vxpose.xlu0.b32.cont [4/16] 0.0, 128
        %654 = vxpose.xlu0.b32.cont [5/16] 0.0, 128
        %655 = vxpose.xlu0.b32.cont [6/16] 0.0, 128
        %656 = vxpose.xlu0.b32.cont [7/16] 0.0, 128
        %657 = vxpose.xlu0.b32.cont [8/16] 0.0, 128
        %658 = vxpose.xlu0.b32.cont [9/16] 0.0, 128
        %659 = vxpose.xlu0.b32.cont [10/16] 0.0, 128
        %660 = vxpose.xlu0.b32.cont [11/16] 0.0, 128
        %661 = vxpose.xlu0.b32.cont [12/16] 0.0, 128
        %662 = vxpose.xlu0.b32.cont [13/16] 0.0, 128
        %663 = vxpose.xlu0.b32.cont [14/16] 0.0, 128
        %664 = vxpose.xlu0.b32.cont [15/16] 0.0, 128
        %665 = vxpose.xlu0.b32.end [16/16] 0.0, 128
        %v666 = vpop.trf.xlu0
        %v667 = vpop.trf.xlu0
        %v668 = vpop.trf.xlu0
        %v669 = vpop.trf.xlu0
        %v670 = vpop.trf.xlu0
        %v671 = vpop.trf.xlu0
        %v672 = vpop.trf.xlu0
        %v673 = vpop.trf.xlu0
        %v674 = vpop.trf.xlu0
        %v675 = vpop.trf.xlu0
        %v676 = vpop.trf.xlu0
        %v677 = vpop.trf.xlu0
        %v678 = vpop.trf.xlu0
        %v679 = vpop.trf.xlu0
        %v680 = vpop.trf.xlu0
        %v681 = vpop.trf.xlu0
        %682 = vxpose.xlu0.b32.start [1/16] %v341, 128
        %683 = vxpose.xlu0.b32.cont [2/16] 0.0, 128
        %684 = vxpose.xlu0.b32.cont [3/16] 0.0, 128
        %685 = vxpose.xlu0.b32.cont [4/16] 0.0, 128
        %686 = vxpose.xlu0.b32.cont [5/16] 0.0, 128
        %687 = vxpose.xlu0.b32.cont [6/16] 0.0, 128
        %688 = vxpose.xlu0.b32.cont [7/16] 0.0, 128
        %689 = vxpose.xlu0.b32.cont [8/16] 0.0, 128
        %690 = vxpose.xlu0.b32.cont [9/16] 0.0, 128
        %691 = vxpose.xlu0.b32.cont [10/16] 0.0, 128
        %692 = vxpose.xlu0.b32.cont [11/16] 0.0, 128
        %693 = vxpose.xlu0.b32.cont [12/16] 0.0, 128
        %694 = vxpose.xlu0.b32.cont [13/16] 0.0, 128
        %695 = vxpose.xlu0.b32.cont [14/16] 0.0, 128
        %696 = vxpose.xlu0.b32.cont [15/16] 0.0, 128
        %697 = vxpose.xlu0.b32.end [16/16] 0.0, 128
        %v698 = vpop.trf.xlu0
        %v699 = vpop.trf.xlu0
        %v700 = vpop.trf.xlu0
        %v701 = vpop.trf.xlu0
        %v702 = vpop.trf.xlu0
        %v703 = vpop.trf.xlu0
        %v704 = vpop.trf.xlu0
        %v705 = vpop.trf.xlu0
        %v706 = vpop.trf.xlu0
        %v707 = vpop.trf.xlu0
        %v708 = vpop.trf.xlu0
        %v709 = vpop.trf.xlu0
        %v710 = vpop.trf.xlu0
        %v711 = vpop.trf.xlu0
        %v712 = vpop.trf.xlu0
        %v713 = vpop.trf.xlu0
        %714 = vxpose.xlu0.b32.start [1/16] %v359, 128
        %715 = vxpose.xlu0.b32.cont [2/16] 0.0, 128
        %716 = vxpose.xlu0.b32.cont [3/16] 0.0, 128
        %717 = vxpose.xlu0.b32.cont [4/16] 0.0, 128
        %718 = vxpose.xlu0.b32.cont [5/16] 0.0, 128
        %719 = vxpose.xlu0.b32.cont [6/16] 0.0, 128
        %720 = vxpose.xlu0.b32.cont [7/16] 0.0, 128
        %721 = vxpose.xlu0.b32.cont [8/16] 0.0, 128
        %722 = vxpose.xlu0.b32.cont [9/16] 0.0, 128
        %723 = vxpose.xlu0.b32.cont [10/16] 0.0, 128
        %724 = vxpose.xlu0.b32.cont [11/16] 0.0, 128
        %725 = vxpose.xlu0.b32.cont [12/16] 0.0, 128
        %726 = vxpose.xlu0.b32.cont [13/16] 0.0, 128
        %727 = vxpose.xlu0.b32.cont [14/16] 0.0, 128
        %728 = vxpose.xlu0.b32.cont [15/16] 0.0, 128
        %729 = vxpose.xlu0.b32.end [16/16] 0.0, 128
        %v730 = vpop.trf.xlu0
        %v731 = vpop.trf.xlu0
        %v732 = vpop.trf.xlu0
        %v733 = vpop.trf.xlu0
        %v734 = vpop.trf.xlu0
        %v735 = vpop.trf.xlu0
        %v736 = vpop.trf.xlu0
        %v737 = vpop.trf.xlu0
        %v738 = vpop.trf.xlu0
        %v739 = vpop.trf.xlu0
        %v740 = vpop.trf.xlu0
        %v741 = vpop.trf.xlu0
        %v742 = vpop.trf.xlu0
        %v743 = vpop.trf.xlu0
        %v744 = vpop.trf.xlu0
        %v745 = vpop.trf.xlu0
        %746 = vxpose.xlu0.b32.start [1/16] %v350, 128
        %747 = vxpose.xlu0.b32.cont [2/16] 0.0, 128
        %748 = vxpose.xlu0.b32.cont [3/16] 0.0, 128
        %749 = vxpose.xlu0.b32.cont [4/16] 0.0, 128
        %750 = vxpose.xlu0.b32.cont [5/16] 0.0, 128
        %751 = vxpose.xlu0.b32.cont [6/16] 0.0, 128
        %752 = vxpose.xlu0.b32.cont [7/16] 0.0, 128
        %753 = vxpose.xlu0.b32.cont [8/16] 0.0, 128
        %754 = vxpose.xlu0.b32.cont [9/16] 0.0, 128
        %755 = vxpose.xlu0.b32.cont [10/16] 0.0, 128
        %756 = vxpose.xlu0.b32.cont [11/16] 0.0, 128
        %757 = vxpose.xlu0.b32.cont [12/16] 0.0, 128
        %758 = vxpose.xlu0.b32.cont [13/16] 0.0, 128
        %759 = vxpose.xlu0.b32.cont [14/16] 0.0, 128
        %760 = vxpose.xlu0.b32.cont [15/16] 0.0, 128
        %761 = vxpose.xlu0.b32.end [16/16] 0.0, 128
        %v762 = vpop.trf.xlu0
        %v763 = vpop.trf.xlu0
        %v764 = vpop.trf.xlu0
        %v765 = vpop.trf.xlu0
        %v766 = vpop.trf.xlu0
        %v767 = vpop.trf.xlu0
        %v768 = vpop.trf.xlu0
        %v769 = vpop.trf.xlu0
        %v770 = vpop.trf.xlu0
        %v771 = vpop.trf.xlu0
        %v772 = vpop.trf.xlu0
        %v773 = vpop.trf.xlu0
        %v774 = vpop.trf.xlu0
        %v775 = vpop.trf.xlu0
        %v776 = vpop.trf.xlu0
        %v777 = vpop.trf.xlu0
        %778 = vxpose.xlu0.b32.start [1/16] %v360, 128
        %779 = vxpose.xlu0.b32.cont [2/16] 0.0, 128
        %780 = vxpose.xlu0.b32.cont [3/16] 0.0, 128
        %781 = vxpose.xlu0.b32.cont [4/16] 0.0, 128
        %782 = vxpose.xlu0.b32.cont [5/16] 0.0, 128
        %783 = vxpose.xlu0.b32.cont [6/16] 0.0, 128
        %784 = vxpose.xlu0.b32.cont [7/16] 0.0, 128
        %785 = vxpose.xlu0.b32.cont [8/16] 0.0, 128
        %786 = vxpose.xlu0.b32.cont [9/16] 0.0, 128
        %787 = vxpose.xlu0.b32.cont [10/16] 0.0, 128
        %788 = vxpose.xlu0.b32.cont [11/16] 0.0, 128
        %789 = vxpose.xlu0.b32.cont [12/16] 0.0, 128
        %790 = vxpose.xlu0.b32.cont [13/16] 0.0, 128
        %791 = vxpose.xlu0.b32.cont [14/16] 0.0, 128
        %792 = vxpose.xlu0.b32.cont [15/16] 0.0, 128
        %793 = vxpose.xlu0.b32.end [16/16] 0.0, 128
        %v794 = vpop.trf.xlu0
        %v795 = vpop.trf.xlu0
        %v796 = vpop.trf.xlu0
        %v797 = vpop.trf.xlu0
        %v798 = vpop.trf.xlu0
        %v799 = vpop.trf.xlu0
        %v800 = vpop.trf.xlu0
        %v801 = vpop.trf.xlu0
        %v802 = vpop.trf.xlu0
        %v803 = vpop.trf.xlu0
        %v804 = vpop.trf.xlu0
        %v805 = vpop.trf.xlu0
        %v806 = vpop.trf.xlu0
        %v807 = vpop.trf.xlu0
        %v808 = vpop.trf.xlu0
        %v809 = vpop.trf.xlu0
        %810 = vxpose.xlu0.b32.start [1/16] %v357, 128
        %811 = vxpose.xlu0.b32.cont [2/16] 0.0, 128
        %812 = vxpose.xlu0.b32.cont [3/16] 0.0, 128
        %813 = vxpose.xlu0.b32.cont [4/16] 0.0, 128
        %814 = vxpose.xlu0.b32.cont [5/16] 0.0, 128
        %815 = vxpose.xlu0.b32.cont [6/16] 0.0, 128
        %816 = vxpose.xlu0.b32.cont [7/16] 0.0, 128
        %817 = vxpose.xlu0.b32.cont [8/16] 0.0, 128
        %818 = vxpose.xlu0.b32.cont [9/16] 0.0, 128
        %819 = vxpose.xlu0.b32.cont [10/16] 0.0, 128
        %820 = vxpose.xlu0.b32.cont [11/16] 0.0, 128
        %821 = vxpose.xlu0.b32.cont [12/16] 0.0, 128
        %822 = vxpose.xlu0.b32.cont [13/16] 0.0, 128
        %823 = vxpose.xlu0.b32.cont [14/16] 0.0, 128
        %824 = vxpose.xlu0.b32.cont [15/16] 0.0, 128
        %825 = vxpose.xlu0.b32.end [16/16] 0.0, 128
        %v826 = vpop.trf.xlu0
        %v827 = vpop.trf.xlu0
        %v828 = vpop.trf.xlu0
        %v829 = vpop.trf.xlu0
        %v830 = vpop.trf.xlu0
        %v831 = vpop.trf.xlu0
        %v832 = vpop.trf.xlu0
        %v833 = vpop.trf.xlu0
        %v834 = vpop.trf.xlu0
        %v835 = vpop.trf.xlu0
        %v836 = vpop.trf.xlu0
        %v837 = vpop.trf.xlu0
        %v838 = vpop.trf.xlu0
        %v839 = vpop.trf.xlu0
        %v840 = vpop.trf.xlu0
        %v841 = vpop.trf.xlu0
        %842 = vxpose.xlu0.b32.start [1/16] %v361, 128
        %843 = vxpose.xlu0.b32.cont [2/16] 0.0, 128
        %844 = vxpose.xlu0.b32.cont [3/16] 0.0, 128
        %845 = vxpose.xlu0.b32.cont [4/16] 0.0, 128
        %846 = vxpose.xlu0.b32.cont [5/16] 0.0, 128
        %847 = vxpose.xlu0.b32.cont [6/16] 0.0, 128
        %848 = vxpose.xlu0.b32.cont [7/16] 0.0, 128
        %849 = vxpose.xlu0.b32.cont [8/16] 0.0, 128
        %850 = vxpose.xlu0.b32.cont [9/16] 0.0, 128
        %851 = vxpose.xlu0.b32.cont [10/16] 0.0, 128
        %852 = vxpose.xlu0.b32.cont [11/16] 0.0, 128
        %853 = vxpose.xlu0.b32.cont [12/16] 0.0, 128
        %854 = vxpose.xlu0.b32.cont [13/16] 0.0, 128
        %855 = vxpose.xlu0.b32.cont [14/16] 0.0, 128
        %856 = vxpose.xlu0.b32.cont [15/16] 0.0, 128
        %857 = vxpose.xlu0.b32.end [16/16] 0.0, 128
        %v858 = vpop.trf.xlu0
        %v859 = vpop.trf.xlu0
        %v860 = vpop.trf.xlu0
        %v861 = vpop.trf.xlu0
        %v862 = vpop.trf.xlu0
        %v863 = vpop.trf.xlu0
        %v864 = vpop.trf.xlu0
        %v865 = vpop.trf.xlu0
        %v866 = vpop.trf.xlu0
        %v867 = vpop.trf.xlu0
        %v868 = vpop.trf.xlu0
        %v869 = vpop.trf.xlu0
        %v870 = vpop.trf.xlu0
        %v871 = vpop.trf.xlu0
        %v872 = vpop.trf.xlu0
        %v873 = vpop.trf.xlu0
        %v874 = vcombine.low %v378, %v442
        %v876 = vunpack.c.l.s4 1983009808
        %v877 = vunpack.c.0.s8 %v876
        %v878 = vlaneseq
        %v879 = vshrl.u32 %v878, 7
        %v880 = vsub.s32 %v877, %v879
        %v881 = vrot.slane %v874, %v880
        %v882 = vcombine.low %v410, %v474
        %v884 = vunpack.c.l.s4 1983009808
        %v885 = vunpack.c.0.s8 %v884
        %v886 = vlaneseq
        %v887 = vshrl.u32 %v886, 7
        %v888 = vsub.s32 %v885, %v887
        %v889 = vrot.slane %v882, %v888
        %v890 = vcombine.low %v506, %v570
        %v892 = vunpack.c.l.s4 1983009808
        %v893 = vunpack.c.0.s8 %v892
        %v894 = vlaneseq
        %v895 = vshrl.u32 %v894, 7
        %v896 = vsub.s32 %v893, %v895
        %v897 = vrot.slane %v890, %v896
        %v898 = vcombine.low %v538, %v602
        %v900 = vunpack.c.l.s4 1983009808
        %v901 = vunpack.c.0.s8 %v900
        %v902 = vlaneseq
        %v903 = vshrl.u32 %v902, 7
        %v904 = vsub.s32 %v901, %v903
        %v905 = vrot.slane %v898, %v904
        %v906 = vcombine.low %v881, %v889
        %v907 = vcombine.high %v881, %v889
        %v909 = vunpack.c.l.s4 1934713408
        %v910 = vunpack.c.0.s8 %v909
        %v911 = vlaneseq
        %v912 = vshrl.u32 %v911, 7
        %v913 = vsub.s32 %v910, %v912
        %v914 = vrot.slane %v906, %v913
        %v916 = vunpack.c.l.s4 1934713408
        %v917 = vunpack.c.0.s8 %v916
        %v918 = vlaneseq
        %v919 = vshrl.u32 %v918, 7
        %v920 = vsub.s32 %v917, %v919
        %v921 = vrot.slane %v907, %v920
        %v922 = vcombine.low %v897, %v905
        %v923 = vcombine.high %v897, %v905
        %v925 = vunpack.c.l.s4 1934713408
        %v926 = vunpack.c.0.s8 %v925
        %v927 = vlaneseq
        %v928 = vshrl.u32 %v927, 7
        %v929 = vsub.s32 %v926, %v928
        %v930 = vrot.slane %v922, %v929
        %v932 = vunpack.c.l.s4 1934713408
        %v933 = vunpack.c.0.s8 %v932
        %v934 = vlaneseq
        %v935 = vshrl.u32 %v934, 7
        %v936 = vsub.s32 %v933, %v935
        %v937 = vrot.slane %v923, %v936
        %v938 = vcombine.low %v914, %v930
        %v939 = vcombine.high %v914, %v930
        %v940 = vcombine.low %v921, %v937
        %v941 = vcombine.high %v921, %v937
        %v942 = vcombine.low %v634, %v698
        %v944 = vunpack.c.l.s4 1983009808
        %v945 = vunpack.c.0.s8 %v944
        %v946 = vlaneseq
        %v947 = vshrl.u32 %v946, 7
        %v948 = vsub.s32 %v945, %v947
        %v949 = vrot.slane %v942, %v948
        %v950 = vcombine.low %v666, %v730
        %v952 = vunpack.c.l.s4 1983009808
        %v953 = vunpack.c.0.s8 %v952
        %v954 = vlaneseq
        %v955 = vshrl.u32 %v954, 7
        %v956 = vsub.s32 %v953, %v955
        %v957 = vrot.slane %v950, %v956
        %v958 = vcombine.low %v762, %v826
        %v960 = vunpack.c.l.s4 1983009808
        %v961 = vunpack.c.0.s8 %v960
        %v962 = vlaneseq
        %v963 = vshrl.u32 %v962, 7
        %v964 = vsub.s32 %v961, %v963
        %v965 = vrot.slane %v958, %v964
        %v966 = vcombine.low %v794, %v858
        %v968 = vunpack.c.l.s4 1983009808
        %v969 = vunpack.c.0.s8 %v968
        %v970 = vlaneseq
        %v971 = vshrl.u32 %v970, 7
        %v972 = vsub.s32 %v969, %v971
        %v973 = vrot.slane %v966, %v972
        %v974 = vcombine.low %v949, %v957
        %v975 = vcombine.high %v949, %v957
        %v977 = vunpack.c.l.s4 1934713408
        %v978 = vunpack.c.0.s8 %v977
        %v979 = vlaneseq
        %v980 = vshrl.u32 %v979, 7
        %v981 = vsub.s32 %v978, %v980
        %v982 = vrot.slane %v974, %v981
        %v984 = vunpack.c.l.s4 1934713408
        %v985 = vunpack.c.0.s8 %v984
        %v986 = vlaneseq
        %v987 = vshrl.u32 %v986, 7
        %v988 = vsub.s32 %v985, %v987
        %v989 = vrot.slane %v975, %v988
        %v990 = vcombine.low %v965, %v973
        %v991 = vcombine.high %v965, %v973
        %v993 = vunpack.c.l.s4 1934713408
        %v994 = vunpack.c.0.s8 %v993
        %v995 = vlaneseq
        %v996 = vshrl.u32 %v995, 7
        %v997 = vsub.s32 %v994, %v996
        %v998 = vrot.slane %v990, %v997
        %v1000 = vunpack.c.l.s4 1934713408
        %v1001 = vunpack.c.0.s8 %v1000
        %v1002 = vlaneseq
        %v1003 = vshrl.u32 %v1002, 7
        %v1004 = vsub.s32 %v1001, %v1003
        %v1005 = vrot.slane %v991, %v1004
        %v1006 = vcombine.low %v982, %v998
        %v1007 = vcombine.high %v982, %v998
        %v1008 = vcombine.low %v989, %v1005
        %v1009 = vcombine.high %v989, %v1005
        %v1010 = vcombine.low %v938, %v940
        %v1011 = vcombine.high %v938, %v940
        %v1013 = vunpack.c.l.s4 1983009808
        %v1014 = vunpack.c.0.s8 %v1013
        %v1015 = vlaneseq
        %v1016 = vshrl.u32 %v1015, 7
        %v1017 = vsub.s32 %v1014, %v1016
        %v1018 = vrot.slane %v1010, %v1017
        %v1020 = vunpack.c.l.s4 1983009808
        %v1021 = vunpack.c.0.s8 %v1020
        %v1022 = vlaneseq
        %v1023 = vshrl.u32 %v1022, 7
        %v1024 = vsub.s32 %v1021, %v1023
        %v1025 = vrot.slane %v1011, %v1024
        %v1026 = vcombine.low %v939, %v941
        %v1027 = vcombine.high %v939, %v941
        %v1029 = vunpack.c.l.s4 1983009808
        %v1030 = vunpack.c.0.s8 %v1029
        %v1031 = vlaneseq
        %v1032 = vshrl.u32 %v1031, 7
        %v1033 = vsub.s32 %v1030, %v1032
        %v1034 = vrot.slane %v1026, %v1033
        %v1036 = vunpack.c.l.s4 1983009808
        %v1037 = vunpack.c.0.s8 %v1036
        %v1038 = vlaneseq
        %v1039 = vshrl.u32 %v1038, 7
        %v1040 = vsub.s32 %v1037, %v1039
        %v1041 = vrot.slane %v1027, %v1040
        %v1042 = vcombine.low %v1018, %v1034
        %v1043 = vcombine.high %v1018, %v1034
        %v1045 = vunpack.c.l.s4 1934713408
        %v1046 = vunpack.c.0.s8 %v1045
        %v1047 = vlaneseq
        %v1048 = vshrl.u32 %v1047, 7
        %v1049 = vsub.s32 %v1046, %v1048
        %v1050 = vrot.slane %v1042, %v1049
        %v1052 = vunpack.c.l.s4 1934713408
        %v1053 = vunpack.c.0.s8 %v1052
        %v1054 = vlaneseq
        %v1055 = vshrl.u32 %v1054, 7
        %v1056 = vsub.s32 %v1053, %v1055
        %v1057 = vrot.slane %v1043, %v1056
        %v1058 = vcombine.low %v1025, %v1041
        %v1059 = vcombine.high %v1025, %v1041
        %v1061 = vunpack.c.l.s4 1934713408
        %v1062 = vunpack.c.0.s8 %v1061
        %v1063 = vlaneseq
        %v1064 = vshrl.u32 %v1063, 7
        %v1065 = vsub.s32 %v1062, %v1064
        %v1066 = vrot.slane %v1058, %v1065
        %v1068 = vunpack.c.l.s4 1934713408
        %v1069 = vunpack.c.0.s8 %v1068
        %v1070 = vlaneseq
        %v1071 = vshrl.u32 %v1070, 7
        %v1072 = vsub.s32 %v1069, %v1071
        %v1073 = vrot.slane %v1059, %v1072
        %v1074 = vcombine.high %v1050, 0.0
        %v1075 = vcombine.high %v1057, 0.0
        %v1076 = vcombine.high %v1066, 0.0
        %v1077 = vcombine.high %v1073, 0.0
        %v1078 = vcombine.low %v1006, %v1008
        %v1079 = vcombine.high %v1006, %v1008
        %v1081 = vunpack.c.l.s4 1983009808
        %v1082 = vunpack.c.0.s8 %v1081
        %v1083 = vlaneseq
        %v1084 = vshrl.u32 %v1083, 7
        %v1085 = vsub.s32 %v1082, %v1084
        %v1086 = vrot.slane %v1078, %v1085
        %v1088 = vunpack.c.l.s4 1983009808
        %v1089 = vunpack.c.0.s8 %v1088
        %v1090 = vlaneseq
        %v1091 = vshrl.u32 %v1090, 7
        %v1092 = vsub.s32 %v1089, %v1091
        %v1093 = vrot.slane %v1079, %v1092
        %v1094 = vcombine.low %v1007, %v1009
        %v1095 = vcombine.high %v1007, %v1009
        %v1097 = vunpack.c.l.s4 1983009808
        %v1098 = vunpack.c.0.s8 %v1097
        %v1099 = vlaneseq
        %v1100 = vshrl.u32 %v1099, 7
        %v1101 = vsub.s32 %v1098, %v1100
        %v1102 = vrot.slane %v1094, %v1101
        %v1104 = vunpack.c.l.s4 1983009808
        %v1105 = vunpack.c.0.s8 %v1104
        %v1106 = vlaneseq
        %v1107 = vshrl.u32 %v1106, 7
        %v1108 = vsub.s32 %v1105, %v1107
        %v1109 = vrot.slane %v1095, %v1108
        %v1110 = vcombine.low %v1086, %v1102
        %v1111 = vcombine.high %v1086, %v1102
        %v1113 = vunpack.c.l.s4 1934713408
        %v1114 = vunpack.c.0.s8 %v1113
        %v1115 = vlaneseq
        %v1116 = vshrl.u32 %v1115, 7
        %v1117 = vsub.s32 %v1114, %v1116
        %v1118 = vrot.slane %v1110, %v1117
        %v1120 = vunpack.c.l.s4 1934713408
        %v1121 = vunpack.c.0.s8 %v1120
        %v1122 = vlaneseq
        %v1123 = vshrl.u32 %v1122, 7
        %v1124 = vsub.s32 %v1121, %v1123
        %v1125 = vrot.slane %v1111, %v1124
        %v1126 = vcombine.low %v1093, %v1109
        %v1127 = vcombine.high %v1093, %v1109
        %v1129 = vunpack.c.l.s4 1934713408
        %v1130 = vunpack.c.0.s8 %v1129
        %v1131 = vlaneseq
        %v1132 = vshrl.u32 %v1131, 7
        %v1133 = vsub.s32 %v1130, %v1132
        %v1134 = vrot.slane %v1126, %v1133
        %v1136 = vunpack.c.l.s4 1934713408
        %v1137 = vunpack.c.0.s8 %v1136
        %v1138 = vlaneseq
        %v1139 = vshrl.u32 %v1138, 7
        %v1140 = vsub.s32 %v1137, %v1139
        %v1141 = vrot.slane %v1127, %v1140
        %v1142 = vcombine.high %v1118, 0.0
        %v1143 = vcombine.high %v1125, 0.0
        %v1144 = vcombine.high %v1134, 0.0
        %v1145 = vcombine.high %v1141, 0.0
        %1147 = vrot.lane.b32.xlu0 %v1074, 2
        %v1148 = vpop.permute.xlu0 %1147
        %1151 = vrot.lane.b32.xlu0 %v1057, 4
        %v1152 = vpop.permute.xlu0 %1151
        %1155 = vrot.lane.b32.xlu0 %v1075, 6
        %v1156 = vpop.permute.xlu0 %1155
        %1159 = vrot.lane.b32.xlu0 %v1066, 8
        %v1160 = vpop.permute.xlu0 %1159
        %1163 = vrot.lane.b32.xlu0 %v1076, 10
        %v1164 = vpop.permute.xlu0 %1163
        %1167 = vrot.lane.b32.xlu0 %v1073, 12
        %v1168 = vpop.permute.xlu0 %1167
        %1171 = vrot.lane.b32.xlu0 %v1077, 14
        %v1172 = vpop.permute.xlu0 %1171
        %1175 = vrot.lane.b32.xlu0 %v1118, 16
        %v1176 = vpop.permute.xlu0 %1175
        %1179 = vrot.lane.b32.xlu0 %v1142, 18
        %v1180 = vpop.permute.xlu0 %1179
        %1183 = vrot.lane.b32.xlu0 %v1125, 20
        %v1184 = vpop.permute.xlu0 %1183
        %1187 = vrot.lane.b32.xlu0 %v1143, 22
        %v1188 = vpop.permute.xlu0 %1187
        %1191 = vrot.lane.b32.xlu0 %v1134, 24
        %v1192 = vpop.permute.xlu0 %1191
        %1195 = vrot.lane.b32.xlu0 %v1144, 26
        %v1196 = vpop.permute.xlu0 %1195
        %1199 = vrot.lane.b32.xlu0 %v1141, 28
        %v1200 = vpop.permute.xlu0 %1199
        %1203 = vrot.lane.b32.xlu0 %v1145, 30
        %v1204 = vpop.permute.xlu0 %1203
        %vm1206 = vcmask 15360
        %v1207 = vsel %vm1206, %v1050, %v1148
        %vm1208 = vcmask 31744
        %v1209 = vsel %vm1208, %v1207, %v1152
        %vm1210 = vcmask 48128
        %v1211 = vsel %vm1210, %v1209, %v1156
        %vm1212 = vcmask 64512
        %v1213 = vsel %vm1212, %v1211, %v1160
        %vm1214 = vcmask 80896
        %v1215 = vsel %vm1214, %v1213, %v1164
        %vm1216 = vcmask 97280
        %v1217 = vsel %vm1216, %v1215, %v1168
        %vm1218 = vcmask 113664
        %v1219 = vsel %vm1218, %v1217, %v1172
        %vm1220 = vcmask 130048
        %v1221 = vsel %vm1220, %v1219, %v1176
        %vm1222 = vcmask 146432
        %v1223 = vsel %vm1222, %v1221, %v1180
        %vm1224 = vcmask 162816
        %v1225 = vsel %vm1224, %v1223, %v1184
        %vm1226 = vcmask 179200
        %v1227 = vsel %vm1226, %v1225, %v1188
        %vm1228 = vcmask 195584
        %v1229 = vsel %vm1228, %v1227, %v1192
        %vm1230 = vcmask 211968
        %v1231 = vsel %vm1230, %v1229, %v1196
        %vm1232 = vcmask 228352
        %v1233 = vsel %vm1232, %v1231, %v1200
        %vm1234 = vcmask 244736
        %v1235 = vsel %vm1234, %v1233, %v1204
        %vm1236 = vcmask 257024
        %1237 = vst.msk [vmem:[%s163] sm:$0xf] %vm1236, %v1235
        %s1238 = sand.u32 %s79, 1
        %s1239 = scalar_lea.sflag [#allocation4], %s1238
        %s1240 = sand.u32 %s79, 1
        %s1241 = smul.addr %s1240, 4
        %s1242 = scalar_lea.vmem [#allocation5], %s1241
        // Predicated region
        $region29: #{tpu_custom_call.1} parent=23 // pred_check
          %p1243 = pneg %p89
        $region30: #{tpu_custom_call.1} parent=23 // pred_check_branch
          %1245 = sbr.rel (%p1243) target = $region32
        $region31: #{tpu_custom_call.1} parent=23 // pred_region
          %s1247 = ssub.s32 64, 64
          %1248 = vsyncadd %s1239, %s1247
          %s1249 = sadd.s32 %s25, %s24
          %s1250 = sadd.s32 %s1249, %s23
          %s1251 = smul.addr %s1250, 64
          %s1252 = scalar_lea.hbm %s1, %s1251
          %s1254 = sshll.u32 %s1242, 4
          %s1255 = int_to_ptr.vmem [resolvable:$true] %s1254
          %1257 = dma.vmem_to_hbm [thread:$0]  %s1255, 64, %s1252, %s1239
        $region32: #{tpu_custom_call.1} parent=23 // pred_fallthru
          _
      $region24: #{tpu_custom_call.1} parent=5 // pred_fallthru
        _
      %p1258 = scmp.le.s32.totalorder 2, %s13
      // Predicated region
      $region33: #{tpu_custom_call.1} parent=5 // pred_check
        %p1259 = pneg %p1258
      $region34: #{tpu_custom_call.1} parent=5 // pred_check_branch
        %1261 = sbr.rel (%p1259) target = $region36
      $region35: #{tpu_custom_call.1} parent=5 // pred_region
        %s1262 = ssub.s32 %s13, 2
        // Predicated region
        $region37: #{tpu_custom_call.1} parent=35 // pred_check
          %p1263 = pneg %p95
        $region38: #{tpu_custom_call.1} parent=35 // pred_check_branch
          %1265 = sbr.rel (%p1263) target = $region40
        $region39: #{tpu_custom_call.1} parent=35 // pred_region
          %s1266 = sand.u32 %s80, 1
          %s1267 = scalar_lea.sflag [#allocation4], %s1266
          %s1268 = sand.u32 %s80, 1
          %s1269 = smul.addr %s1268, 4
          %s1270 = scalar_lea.vmem [#allocation5], %s1269
          %1271 = dma.done %s1267, 64
        $region40: #{tpu_custom_call.1} parent=35 // pred_fallthru
          _
      $region36: #{tpu_custom_call.1} parent=5 // pred_fallthru
        _
    $region6: #{tpu_custom_call.1} parent=1 // loop_footer
      %s17 = sadd.s32 1, %s13
    $region7: #{tpu_custom_call.1} parent=1 // loop_footer_branch
      %12 = sbr.rel target = $region3
    $region8: #{tpu_custom_call.1} parent=1 // loop_exit
      _
    %1272 = vsyncpa [#allocation3], 1
    %s1273 = scalar_lea.sflag [#allocation3], 1
    %1274 = vsyncpa %s1273, 1
    %1275 = vsyncpa [#allocation4], 1
    %s1276 = scalar_lea.sflag [#allocation4], 1
    %1277 = vsyncpa %s1276, 1

</llo_original>
